<compile_context>
chip_gen: v7x
topology: tpu7x:2x2x1
jax: 0.10.0
libtpu: 0.0.40
codegen_flags: <defaults>
</compile_context>

<pallas_src>
import jax
import jax.numpy as jnp
from jax.experimental import pallas as pl
from jax.experimental.pallas import tpu as pltpu


# --------------------------------------------------------------------------
# Kernel
# --------------------------------------------------------------------------
def _make_gcn_cond_kernel(xw_resident, tk, n_batch):
    """Build the kernel body.  Grid = (row_tiles, k_tiles); k (reduction over
    A columns) is the last grid axis.

    a_ref    : [TM, TK]                bf16  tile of normalized adjacency
    xw_ref   : [N_PAD, COUT_PAD] (resident) or [TK, COUT_PAD] (streamed), bf16
    proj_ref : [B, COUT_PAD]           f32   hoisted time+cond projection + biases
    out_ref  : [B, TM, COUT_PAD]       f32
    acc_ref  : [TM, COUT_PAD]          f32   accumulator scratch
    """

    def kernel(a_ref, xw_ref, proj_ref, out_ref, acc_ref):
        k = pl.program_id(1)

        if xw_resident:
            off = pl.multiple_of(k * tk, tk)
            xw_blk = xw_ref[pl.ds(off, tk), :]
        else:
            xw_blk = xw_ref[...]

        # Dominant work: A_tile @ XW_slice, bf16 operands, f32 MXU accumulation.
        part = jnp.dot(a_ref[...], xw_blk, preferred_element_type=jnp.float32)

        @pl.when(k == 0)
        def _():
            acc_ref[...] = part          # first partial: no zero-init RMW pass

        @pl.when(k > 0)
        def _():
            acc_ref[...] += part

        @pl.when(k == pl.num_programs(1) - 1)
        def _():
            # Per-batch stores: keep live data to one [TM, COUT_PAD] chunk and
            # let stores issue incrementally (no [B, TM, COUT_PAD] temporary).
            for bb in range(n_batch):
                out_ref[bb, :, :] = (acc_ref[...]
                                     + proj_ref[bb:bb + 1, :]).astype(out_ref.dtype)

    return kernel


# --------------------------------------------------------------------------
# Plain-JAX glue
# --------------------------------------------------------------------------
def _dense_gcn_norm_adj(edge_index, num_nodes):
    """Dense normalized aggregation matrix A_norm such that
    (A_norm @ X)[i] == sum_{j->i} deg^{-1/2}[j] * deg^{-1/2}[i] * X[j],
    with self-loops added (PyG gcn_norm semantics, edge_weight = 1).
    TODO(synk): edge_weight / improved / add_self_loops=False variants."""
    row = edge_index[0]
    col = edge_index[1]
    loop = jnp.arange(num_nodes, dtype=edge_index.dtype)
    row = jnp.concatenate([row, loop])
    col = jnp.concatenate([col, loop])
    ew = jnp.ones(row.shape[0], dtype=jnp.float32)
    deg = jnp.zeros((num_nodes,), jnp.float32).at[col].add(ew)
    deg_inv_sqrt = jnp.where(deg > 0, 1.0 / jnp.sqrt(deg), 0.0)
    norm = deg_inv_sqrt[row] * ew * deg_inv_sqrt[col]
    a = jnp.zeros((num_nodes, num_nodes), jnp.float32).at[col, row].add(norm)
    return a


def _round_up(v, m):
    return ((v + m - 1) // m) * m


def _clamp_tile(requested, n):
    """Largest power-of-two multiple of 128 that is <= requested and <= the
    128-padded problem size (so every tile evenly divides n_pad)."""
    t = max(128, min(requested, _round_up(n, 128)))
    p = 128
    while p * 2 <= t:
        p *= 2
    return p


def _vmem_capacity_bytes():
    """Per-TensorCore VMEM capacity; falls back to the v7x value (smallest)."""
    try:
        return int(pltpu.get_tpu_info().vmem_capacity_bytes)
    except Exception:
        return 64 * 1024 * 1024


# --------------------------------------------------------------------------
# Wrapper
# --------------------------------------------------------------------------
def gcn_conv_with_time_and_condition(x, t_emb, c_emb, edge_index, params,
                                     *, tm=1024, tk=2048,
                                     out_dtype=jnp.float32):
    """Tiled Pallas forward.  Large default tiles amortize per-step pipeline
    overhead (kernel is HBM-bound on A); tiles auto-shrink to the VMEM budget
    of the current generation (v7x: 64 MiB/TC, v5e/v6e: 128 MiB)."""
    n, _ = x.shape
    b = t_emb.shape[0]
    cout = params["conv_w"].shape[1]

    # ---- padding / tiling -------------------------------------------------
    cout_pad = _round_up(cout, 128)                 # lane-dense output stores
    tm = _clamp_tile(tm, n)
    tk = _clamp_tile(tk, n)

    vmem_cap = _vmem_capacity_bytes()
    budget = int(0.6 * vmem_cap)                    # headroom for compiler temps

    # XW stays fully VMEM-resident when it is small relative to the budget.
    n_pad0 = _round_up(n, max(tm, tk))
    xw_resident = (2 * n_pad0 * cout_pad * 2) <= budget // 3

    def working_set(tm_, tk_, n_pad_):
        ws = 2 * tm_ * tk_ * 2                                        # A dbl-buf bf16
        ws += 2 * (n_pad_ if xw_resident else tk_) * cout_pad * 2     # XW bf16
        ws += tm_ * cout_pad * 4                                      # f32 acc
        ws += 2 * b * tm_ * cout_pad * 4                              # out dbl-buf
        ws += 2 * b * cout_pad * 4                                    # proj resident
        return ws

    # Shrink tiles until the double-buffered working set fits the budget.
    while True:
        n_pad = _round_up(n, max(tm, tk))
        ws = working_set(tm, tk, n_pad)
        if ws <= budget or (tm == 128 and tk == 128):
            break
        if tk >= tm and tk > 128:
            tk //= 2
        elif tm > 128:
            tm //= 2
        else:
            break

    grid = (n_pad // tm, n_pad // tk)

    # Raise the scoped-VMEM limit above the 16/32 MiB defaults; cap at 75% of
    # physical per-core VMEM (48 MiB on v7x, 96 MiB on v5e/v6e).
    vmem_limit = int(min(max(int(1.5 * ws), 32 * 1024 * 1024),
                         int(0.75 * vmem_cap)))

    # ---- operand prep (glue, outside the kernel) --------------------------
    # Cast BEFORE padding so the prep path never writes an f32 (n_pad, n_pad).
    a_norm = _dense_gcn_norm_adj(edge_index, n)
    a_pad = jnp.pad(a_norm.astype(jnp.bfloat16),
                    ((0, n_pad - n), (0, n_pad - n)))

    # Hoisted loop-invariant matmul: XW = x @ Wc (tiny vs the O(N^2) aggregate).
    xw = x.astype(jnp.float32) @ params["conv_w"]                     # [N, Cout]
    xw_pad = jnp.pad(xw.astype(jnp.bfloat16),
                     ((0, n_pad - n), (0, cout_pad - cout)))

    # Fully hoisted projection: time_proj(t) + cond_proj(c) + conv bias.
    proj = (t_emb.astype(jnp.float32) @ params["time_w"]
            + c_emb.astype(jnp.float32) @ params["cond_w"]
            + params["time_b"] + params["cond_b"] + params["conv_b"])  # [B, Cout]
    proj_pad = jnp.pad(proj.astype(jnp.float32),
                       ((0, 0), (0, cout_pad - cout)))

    # ---- specs -------------------------------------------------------------
    if xw_resident:
        xw_spec = pl.BlockSpec((n_pad, cout_pad), lambda i, k: (0, 0))  # resident
    else:
        xw_spec = pl.BlockSpec((tk, cout_pad), lambda i, k: (k, 0))     # streamed

    in_specs = [
        pl.BlockSpec((tm, tk), lambda i, k: (i, k)),            # A tile
        xw_spec,                                                # XW
        pl.BlockSpec((b, cout_pad), lambda i, k: (0, 0)),       # proj (resident)
    ]
    out_spec = pl.BlockSpec((b, tm, cout_pad), lambda i, k: (0, i, 0))

    # ---- cost hint (bytes include the actual XW traffic) -------------------
    out_bytes_per_el = jnp.dtype(out_dtype).itemsize
    xw_reads = 1 if xw_resident else (n_pad // tm)
    cost = pl.CostEstimate(
        flops=int(2 * n_pad * n_pad * cout_pad),
        transcendentals=0,
        bytes_accessed=int(n_pad * n_pad * 2                      # A (bf16)
                           + xw_reads * n_pad * cout_pad * 2      # XW (bf16)
                           + b * cout_pad * 4                     # proj
                           + b * n_pad * cout_pad * out_bytes_per_el),
    )

    kernel = _make_gcn_cond_kernel(xw_resident, tk, b)

    out_full = pl.pallas_call(
        kernel,
        out_shape=jax.ShapeDtypeStruct((b, n_pad, cout_pad), out_dtype),
        grid_spec=pltpu.PrefetchScalarGridSpec(
            num_scalar_prefetch=0,
            grid=grid,
            in_specs=in_specs,
            out_specs=out_spec,
            scratch_shapes=[pltpu.VMEM((tm, cout_pad), jnp.float32)],
        ),
        compiler_params=pltpu.CompilerParams(
            dimension_semantics=("parallel", "arbitrary"),
            vmem_limit_bytes=vmem_limit,
        ),
        cost_estimate=cost,
    )(a_pad, xw_pad, proj_pad)

    # Slice off row / channel padding.
    return out_full[:, :n, :cout]


# --------------------------------------------------------------------------
# Params
# --------------------------------------------------------------------------
def init_params(key, in_channels, out_channels, time_channels, condition_channels):
    ks = jax.random.split(key, 6)
    scale = 0.1
    return {
        # GCNConv linear weight stored transposed: [Cin, Cout], bias [Cout]
        "conv_w": scale * jax.random.normal(ks[0], (in_channels, out_channels), jnp.float32),
        "conv_b": scale * jax.random.normal(ks[1], (out_channels,), jnp.float32),
        "time_w": scale * jax.random.normal(ks[2], (time_channels, out_channels), jnp.float32),
        "time_b": scale * jax.random.normal(ks[3], (out_channels,), jnp.float32),
        "cond_w": scale * jax.random.normal(ks[4], (condition_channels, out_channels), jnp.float32),
        "cond_b": scale * jax.random.normal(ks[5], (out_channels,), jnp.float32),
    }


# --------------------------------------------------------------------------
# Test
# --------------------------------------------------------------------------
if __name__ == "__main__":
    N = 16            # nodes
    CIN = 8           # in_channels
    COUT = 32         # out_channels
    CT = 16           # time_channels
    CC = 16           # condition_channels
    B = 2             # batch of time/condition embeddings

    key = jax.random.PRNGKey(0)
    k_x, k_t, k_c, k_p = jax.random.split(key, 4)

    x = jax.random.normal(k_x, (N, CIN), jnp.float32)
    t_emb = jax.random.normal(k_t, (B, CT), jnp.float32)
    c_emb = jax.random.normal(k_c, (B, CC), jnp.float32)

    # Bidirectional ring graph: edges i -> (i+1)%N and (i+1)%N -> i.
    src = jnp.arange(N, dtype=jnp.int32)
    dst = (src + 1) % N
    edge_index = jnp.concatenate(
        [jnp.stack([src, dst], axis=0), jnp.stack([dst, src], axis=0)], axis=1
    )  # [2, 2N]

    params = init_params(k_p, CIN, COUT, CT, CC)

    out = gcn_conv_with_time_and_condition(x, t_emb, c_emb, edge_index, params)
    out = jax.block_until_ready(out)
    assert out.shape == (B, N, COUT)

    # Reference mirroring the kernel's dtype path (bf16 A / XW, f32 accumulate).
    a_norm = _dense_gcn_norm_adj(edge_index, N)
    xw = x @ params["conv_w"]
    a_bf = a_norm.astype(jnp.bfloat16).astype(jnp.float32)
    xw_bf = xw.astype(jnp.bfloat16).astype(jnp.float32)
    h_ref = a_bf @ xw_bf + params["conv_b"]
    t_ref = t_emb @ params["time_w"] + params["time_b"]
    c_ref = c_emb @ params["cond_w"] + params["cond_b"]
    ref = h_ref[None, :, :] + t_ref[:, None, :] + c_ref[:, None, :]
    assert jnp.allclose(out, ref, atol=1e-3, rtol=1e-3), float(jnp.max(jnp.abs(out - ref)))

    # Loose check against the exact f32 PyTorch-module semantics.
    h32 = a_norm @ xw + params["conv_b"]
    ref32 = h32[None, :, :] + t_ref[:, None, :] + c_ref[:, None, :]
    assert jnp.allclose(out, ref32, atol=5e-2, rtol=5e-2)

    print("KERNEL_OK")
</pallas_src>

<mosaic_0001>
module attributes {stable_mosaic.version = 11 : i64} {
  func.func @kernel(%arg0: i32, %arg1: i32, %arg2: memref<128x128xbf16, #tpu.memory_space<vmem>>, %arg3: memref<128x128xbf16, #tpu.memory_space<vmem>>, %arg4: memref<2x128xf32, #tpu.memory_space<vmem>>, %arg5: memref<2x128x128xf32, #tpu.memory_space<vmem>>, %arg6: memref<128x128xf32, #tpu.memory_space<vmem>>) attributes {dimension_semantics = [#tpu.dimension_semantics<parallel>, #tpu.dimension_semantics<arbitrary>], iteration_bounds = array<i64: 1, 1>, scalar_prefetch = 0 : i64, scratch_operands = 1 : i64, tpu.core_type = #tpu.core_type<tc>, window_params = [{transform_indices = @transform_0, window_bounds = array<i64: 128, 128>}, {pipeline_mode = #tpu.pipeline_mode<synchronous>, transform_indices = @transform_1, window_bounds = array<i64: 128, 128>}, {pipeline_mode = #tpu.pipeline_mode<synchronous>, transform_indices = @transform_2, window_bounds = array<i64: 2, 128>}, {transform_indices = @transform_3, window_bounds = array<i64: 2, 128, 128>}]} {
    %c128_i32 = arith.constant 128 : i32
    %0 = arith.muli %arg1, %c128_i32 : i32
    %1 = tpu.assume_multiple %0, 128 : i32
    %2 = arith.index_cast %1 : i32 to index
    %c0 = arith.constant 0 : index
    %3 = vector.load %arg3[%2, %c0] : memref<128x128xbf16, #tpu.memory_space<vmem>>, vector<128x128xbf16>
    %c0_0 = arith.constant 0 : index
    %c0_1 = arith.constant 0 : index
    %4 = vector.load %arg2[%c0_0, %c0_1] : memref<128x128xbf16, #tpu.memory_space<vmem>>, vector<128x128xbf16>
    %cst = arith.constant dense<0.000000e+00> : vector<128x128xf32>
    %5 = tpu.matmul %4, %3, %cst {dimension_numbers = #tpu.dot_dimension_numbers<[1], [0], [0], [1], [0, 0, 1, 1], [], []>} : vector<128x128xbf16>, vector<128x128xbf16>, vector<128x128xf32> -> vector<128x128xf32>
    %c0_i32 = arith.constant 0 : i32
    %6 = arith.cmpi eq, %arg1, %c0_i32 : i32
    %7 = arith.extui %6 : i1 to i32
    %c0_i32_2 = arith.constant 0 : i32
    %8 = arith.cmpi ne, %7, %c0_i32_2 : i32
    scf.if %8 {
      %c0_7 = arith.constant 0 : index
      %c0_8 = arith.constant 0 : index
      %15 = vector.load %arg6[%c0_7, %c0_8] : memref<128x128xf32, #tpu.memory_space<vmem>>, vector<128x128xf32>
      tpu.vector_store %arg6[%c0_7, %c0_8], %5 {strides = array<i32>} : memref<128x128xf32, #tpu.memory_space<vmem>>, vector<128x128xf32>,
    } else {
    }
    %c0_i32_3 = arith.constant 0 : i32
    %9 = arith.cmpi sgt, %arg1, %c0_i32_3 : i32
    %10 = arith.extui %9 : i1 to i32
    %c0_i32_4 = arith.constant 0 : i32
    %11 = arith.cmpi ne, %10, %c0_i32_4 : i32
    scf.if %11 {
      %c0_7 = arith.constant 0 : index
      %c0_8 = arith.constant 0 : index
      %15 = vector.load %arg6[%c0_7, %c0_8] : memref<128x128xf32, #tpu.memory_space<vmem>>, vector<128x128xf32>
      %16 = arith.addf %15, %5 : vector<128x128xf32>
      %c0_9 = arith.constant 0 : index
      %c0_10 = arith.constant 0 : index
      %17 = vector.load %arg6[%c0_9, %c0_10] : memref<128x128xf32, #tpu.memory_space<vmem>>, vector<128x128xf32>
      tpu.vector_store %arg6[%c0_9, %c0_10], %16 {strides = array<i32>} : memref<128x128xf32, #tpu.memory_space<vmem>>, vector<128x128xf32>,
    } else {
    }
    %c0_i32_5 = arith.constant 0 : i32
    %12 = arith.cmpi eq, %arg1, %c0_i32_5 : i32
    %13 = arith.extui %12 : i1 to i32
    %c0_i32_6 = arith.constant 0 : i32
    %14 = arith.cmpi ne, %13, %c0_i32_6 : i32
    scf.if %14 {
      %c0_7 = arith.constant 0 : index
      %c0_8 = arith.constant 0 : index
      %15 = vector.load %arg6[%c0_7, %c0_8] : memref<128x128xf32, #tpu.memory_space<vmem>>, vector<128x128xf32>
      %c0_9 = arith.constant 0 : index
      %c0_10 = arith.constant 0 : index
      %16 = vector.load %arg4[%c0_9, %c0_10] : memref<2x128xf32, #tpu.memory_space<vmem>>, vector<1x128xf32>
      %17 = vector.broadcast %16 : vector<1x128xf32> to vector<128x128xf32>
      %18 = arith.addf %15, %17 : vector<128x128xf32>
      %c0_11 = arith.constant 0 : index
      %c0_12 = arith.constant 0 : index
      %c0_13 = arith.constant 0 : index
      %19 = vector.load %arg5[%c0_11, %c0_12, %c0_13] : memref<2x128x128xf32, #tpu.memory_space<vmem>>, vector<1x128x128xf32>
      %20 = vector.shape_cast %19 : vector<1x128x128xf32> to vector<128x128xf32>
      %21 = vector.shape_cast %18 : vector<128x128xf32> to vector<1x128x128xf32>
      tpu.vector_store %arg5[%c0_11, %c0_12, %c0_13], %21 {strides = array<i32>} : memref<2x128x128xf32, #tpu.memory_space<vmem>>, vector<1x128x128xf32>,
      %c0_14 = arith.constant 0 : index
      %c0_15 = arith.constant 0 : index
      %22 = vector.load %arg6[%c0_14, %c0_15] : memref<128x128xf32, #tpu.memory_space<vmem>>, vector<128x128xf32>
      %c1 = arith.constant 1 : index
      %c0_16 = arith.constant 0 : index
      %23 = vector.load %arg4[%c1, %c0_16] : memref<2x128xf32, #tpu.memory_space<vmem>>, vector<1x128xf32>
      %24 = vector.broadcast %23 : vector<1x128xf32> to vector<128x128xf32>
      %25 = arith.addf %22, %24 : vector<128x128xf32>
      %c1_17 = arith.constant 1 : index
      %c0_18 = arith.constant 0 : index
      %c0_19 = arith.constant 0 : index
      %26 = vector.load %arg5[%c1_17, %c0_18, %c0_19] : memref<2x128x128xf32, #tpu.memory_space<vmem>>, vector<1x128x128xf32>
      %27 = vector.shape_cast %26 : vector<1x128x128xf32> to vector<128x128xf32>
      %28 = vector.shape_cast %25 : vector<128x128xf32> to vector<1x128x128xf32>
      tpu.vector_store %arg5[%c1_17, %c0_18, %c0_19], %28 {strides = array<i32>} : memref<2x128x128xf32, #tpu.memory_space<vmem>>, vector<1x128x128xf32>,
    } else {
    }
    return
  }
  func.func @transform_0(%arg0: i32, %arg1: i32) -> (i32, i32) {
    %c0_i32 = arith.constant 0 : i32
    return %arg0, %arg1 : i32, i32
  }
  func.func @transform_1(%arg0: i32, %arg1: i32) -> (i32, i32) {
    %c0_i32 = arith.constant 0 : i32
    %c0_i32_0 = arith.constant 0 : i32
    %c0_i32_1 = arith.constant 0 : i32
    return %c0_i32, %c0_i32_0 : i32, i32
  }
  func.func @transform_2(%arg0: i32, %arg1: i32) -> (i32, i32) {
    %c0_i32 = arith.constant 0 : i32
    %c0_i32_0 = arith.constant 0 : i32
    %c0_i32_1 = arith.constant 0 : i32
    return %c0_i32, %c0_i32_0 : i32, i32
  }
  func.func @transform_3(%arg0: i32, %arg1: i32) -> (i32, i32, i32) {
    %c0_i32 = arith.constant 0 : i32
    %c0_i32_0 = arith.constant 0 : i32
    %c0_i32_1 = arith.constant 0 : i32
    return %c0_i32, %arg0, %c0_i32_0 : i32, i32, i32
  }
}

</mosaic_0001>

<llo_original>
// kernel: tpu_custom_call.1
$region0: #{tpu_custom_call.1}
  #allocation0 [shape = 'u32[]', space=smem, size = 0x4, offset = 0x4, fixed_abs, tag = 'smem constant byte address 0x4 - core index']
  #allocation1 [shape = 'u32[144,128]{1,0:T(1,128)}', space=vmem, size = 0x12000, scoped, tag = 'internal scratch']
  #allocation2 [shape = 'f32[128,128]{1,0:T(8,128)}', space=vmem, size = 0x10000, scoped, tag = 'scratch operand']
  %s0 = inlined_call_operand.hbm [shape: bf16[128,128], index: 0, kind: input, shape index: {}]
  %s1 = inlined_call_operand.hbm [shape: bf16[128,128], index: 1, kind: input, shape index: {}]
  %s2 = inlined_call_operand.vmem [shape: f32[2,128], index: 2, kind: input, shape index: {}]
  %s3 = inlined_call_operand.hbm [shape: f32[2,128,128], index: 3, kind: output, shape index: {}]
  %s4 = sld [smem:[#allocation0]]
  $region42: #{tpu_custom_call.1} parent=0
    _
  %s6 = ssub.s32 1, %s4
  %s7 = scalar_select 0, %s6, %s4
  $region1: #{tpu_custom_call.1} parent=0
    #allocation3 [shape = 'u8[32768]{0}', space=vmem, size = 0x8000, scoped, tag = 'input window, operand 0, single buffered']
    #allocation4 [shape = 's32[1]{0}', space=sflag, size = 0x4, scoped, tag = 'scoped memory for tpu_custom_call.1']
    #allocation5 [shape = 's32[1]{0}', space=sflag, size = 0x4, scoped, tag = 'scoped memory for tpu_custom_call.1']
    #allocation6 [shape = 'u8[32768]{0}', space=vmem, size = 0x8000, scoped, tag = 'input window, operand 1, single buffered']
    #allocation7 [shape = 's32[1]{0}', space=sflag, size = 0x4, scoped, tag = 'scoped memory for tpu_custom_call.1']
    #allocation8 [shape = 'u8[131072]{0}', space=vmem, size = 0x20000, scoped, tag = 'output window, operand 0, single buffered']
    %8 = vsyncpa [#allocation4], 0
    %9 = vsyncpa [#allocation7], 0
    %10 = vsyncpa [#allocation5], 0
    // Predicated region
    $region2: #{tpu_custom_call.1} parent=1 // pred_check
      _
    $region3: #{tpu_custom_call.1} parent=1 // pred_check_branch
      %12 = sbr.rel (0) target = $region5
    $region4: #{tpu_custom_call.1} parent=1 // pred_region
      %s14 = ssub.s32 1024, 1024
      %15 = vsyncadd [#allocation4], %s14
      %s16 = sshll.u32 [#allocation3], 4
      %s17 = int_to_ptr.vmem [resolvable:$true] %s16
      %22 = dma.hbm_to_vmem [thread:$0]  %s0, 1024, %s17, [#allocation4], 64, 64, 4
    $region5: #{tpu_custom_call.1} parent=1 // pred_fallthru
      _
    // Predicated region
    $region6: #{tpu_custom_call.1} parent=1 // pred_check
      _
    $region7: #{tpu_custom_call.1} parent=1 // pred_check_branch
      %24 = sbr.rel (0) target = $region9
    $region8: #{tpu_custom_call.1} parent=1 // pred_region
      %s26 = ssub.s32 1024, 1024
      %27 = vsyncadd [#allocation7], %s26
      %s28 = sshll.u32 [#allocation6], 4
      %s29 = int_to_ptr.vmem [resolvable:$true] %s28
      %34 = dma.hbm_to_vmem [thread:$0]  %s1, 1024, %s29, [#allocation7], 64, 64, 4
    $region9: #{tpu_custom_call.1} parent=1 // pred_fallthru
      _
    // Predicated region
    $region10: #{tpu_custom_call.1} parent=1 // pred_check
      _
    $region11: #{tpu_custom_call.1} parent=1 // pred_check_branch
      %36 = sbr.rel (0) target = $region13
    $region12: #{tpu_custom_call.1} parent=1 // pred_region
      _
    $region13: #{tpu_custom_call.1} parent=1 // pred_fallthru
      _
    // Predicated region
    $region14: #{tpu_custom_call.1} parent=1 // pred_check
      _
    $region15: #{tpu_custom_call.1} parent=1 // pred_check_branch
      %38 = sbr.rel (0) target = $region17
    $region16: #{tpu_custom_call.1} parent=1 // pred_region
      %39 = dma.done [#allocation4], 1024
    $region17: #{tpu_custom_call.1} parent=1 // pred_fallthru
      _
    // Predicated region
    $region18: #{tpu_custom_call.1} parent=1 // pred_check
      _
    $region19: #{tpu_custom_call.1} parent=1 // pred_check_branch
      %41 = sbr.rel (0) target = $region21
    $region20: #{tpu_custom_call.1} parent=1 // pred_region
      %42 = dma.done [#allocation7], 1024
    $region21: #{tpu_custom_call.1} parent=1 // pred_fallthru
      _
    %s44 = smul.u32 0, 128
    %s45 = sshra.s32 %s44, 3
    %s46 = sand.u32 %s44, 7
    %s47 = smul.addr %s45, 4
    %s48 = scalar_lea.vmem [#allocation6], %s47
    %v49 = vld [vmem:[%s48] sm:$0xf]
    %v50 = vld [vmem:[%s48 + $0x4] sm:$0xf]
    %v51 = vld [vmem:[%s48 + $0x8] sm:$0xf]
    %v52 = vld [vmem:[%s48 + $0xc] sm:$0xf]
    %v53 = vld [vmem:[%s48 + $0x10] sm:$0xf]
    %v54 = vld [vmem:[%s48 + $0x14] sm:$0xf]
    %v55 = vld [vmem:[%s48 + $0x18] sm:$0xf]
    %v56 = vld [vmem:[%s48 + $0x1c] sm:$0xf]
    %v57 = vld [vmem:[%s48 + $0x20] sm:$0xf]
    %v58 = vld [vmem:[%s48 + $0x24] sm:$0xf]
    %v59 = vld [vmem:[%s48 + $0x28] sm:$0xf]
    %v60 = vld [vmem:[%s48 + $0x2c] sm:$0xf]
    %v61 = vld [vmem:[%s48 + $0x30] sm:$0xf]
    %v62 = vld [vmem:[%s48 + $0x34] sm:$0xf]
    %v63 = vld [vmem:[%s48 + $0x38] sm:$0xf]
    %v64 = vld [vmem:[%s48 + $0x3c] sm:$0xf]
    %v65 = vld [vmem:[#allocation3] sm:$0xf]
    %v66 = vld [vmem:[#allocation3 + $0x4] sm:$0xf]
    %v67 = vld [vmem:[#allocation3 + $0x8] sm:$0xf]
    %v68 = vld [vmem:[#allocation3 + $0xc] sm:$0xf]
    %v69 = vld [vmem:[#allocation3 + $0x10] sm:$0xf]
    %v70 = vld [vmem:[#allocation3 + $0x14] sm:$0xf]
    %v71 = vld [vmem:[#allocation3 + $0x18] sm:$0xf]
    %v72 = vld [vmem:[#allocation3 + $0x1c] sm:$0xf]
    %v73 = vld [vmem:[#allocation3 + $0x20] sm:$0xf]
    %v74 = vld [vmem:[#allocation3 + $0x24] sm:$0xf]
    %v75 = vld [vmem:[#allocation3 + $0x28] sm:$0xf]
    %v76 = vld [vmem:[#allocation3 + $0x2c] sm:$0xf]
    %v77 = vld [vmem:[#allocation3 + $0x30] sm:$0xf]
    %v78 = vld [vmem:[#allocation3 + $0x34] sm:$0xf]
    %v79 = vld [vmem:[#allocation3 + $0x38] sm:$0xf]
    %v80 = vld [vmem:[#allocation3 + $0x3c] sm:$0xf]
    %v97 = vunpack.c.l.b16 %v65
    %v98 = vunpack.c.l.b16 %v66
    %v99 = vunpack.c.l.b16 %v67
    %v100 = vunpack.c.l.b16 %v68
    %v101 = vunpack.c.l.b16 %v69
    %v102 = vunpack.c.l.b16 %v70
    %v103 = vunpack.c.l.b16 %v71
    %v104 = vunpack.c.l.b16 %v72
    %v105 = vunpack.c.l.b16 %v73
    %v106 = vunpack.c.l.b16 %v74
    %v107 = vunpack.c.l.b16 %v75
    %v108 = vunpack.c.l.b16 %v76
    %v109 = vunpack.c.l.b16 %v77
    %v110 = vunpack.c.l.b16 %v78
    %v111 = vunpack.c.l.b16 %v79
    %v112 = vunpack.c.l.b16 %v80
    %v113 = vpack.c.b16 %v98, %v97
    %v114 = vpack.c.b16 %v100, %v99
    %v115 = vpack.c.b16 %v102, %v101
    %v116 = vpack.c.b16 %v104, %v103
    %v117 = vpack.c.b16 %v106, %v105
    %v118 = vpack.c.b16 %v108, %v107
    %v119 = vpack.c.b16 %v110, %v109
    %v120 = vpack.c.b16 %v112, %v111
    %v145 = vunpack.c.l.b16 %v49
    %v146 = vunpack.c.l.b16 %v50
    %v147 = vunpack.c.l.b16 %v51
    %v148 = vunpack.c.l.b16 %v52
    %v149 = vunpack.c.l.b16 %v53
    %v150 = vunpack.c.l.b16 %v54
    %v151 = vunpack.c.l.b16 %v55
    %v152 = vunpack.c.l.b16 %v56
    %v153 = vunpack.c.l.b16 %v57
    %v154 = vunpack.c.l.b16 %v58
    %v155 = vunpack.c.l.b16 %v59
    %v156 = vunpack.c.l.b16 %v60
    %v157 = vunpack.c.l.b16 %v61
    %v158 = vunpack.c.l.b16 %v62
    %v159 = vunpack.c.l.b16 %v63
    %v160 = vunpack.c.l.b16 %v64
    %v161 = vpack.c.b16 %v146, %v145
    %v162 = vpack.c.b16 %v148, %v147
    %v163 = vpack.c.b16 %v150, %v149
    %v164 = vpack.c.b16 %v152, %v151
    %v165 = vpack.c.b16 %v154, %v153
    %v166 = vpack.c.b16 %v156, %v155
    %v167 = vpack.c.b16 %v158, %v157
    %v168 = vpack.c.b16 %v160, %v159
    %177 = vmatprep.subr.bf16.mxu0 0
    %178 = vmatpush1.bf16.msra.mxu0 %v161
    %179 = vmatprep.subr.bf16.mxu0 0
    %180 = vmatpush1.bf16.msra.mxu0 %v162
    %181 = vmatprep.subr.bf16.mxu0 0
    %182 = vmatpush1.bf16.msra.mxu0 %v163
    %183 = vmatprep.subr.bf16.mxu0 0
    %184 = vmatpush1.bf16.msra.mxu0 %v164
    %185 = vmatprep.subr.bf16.mxu0 0
    %186 = vmatpush1.bf16.msra.mxu0 %v165
    %187 = vmatprep.subr.bf16.mxu0 0
    %188 = vmatpush1.bf16.msra.mxu0 %v166
    %189 = vmatprep.subr.bf16.mxu0 0
    %190 = vmatpush1.bf16.msra.mxu0 %v167
    %191 = vmatprep.subr.bf16.mxu0 0
    %192 = vmatpush1.bf16.msra.mxu0 %v168
    %193 = vmatprep.subr.bf16.mxu0 0
    %194 = vmatpush1.bf16.msra.mxu0 0
    %195 = vmatprep.subr.bf16.mxu0 0
    %196 = vmatpush1.bf16.msra.mxu0 0
    %197 = vmatprep.subr.bf16.mxu0 0
    %198 = vmatpush1.bf16.msra.mxu0 0
    %199 = vmatprep.subr.bf16.mxu0 0
    %200 = vmatpush1.bf16.msra.mxu0 0
    %201 = vmatprep.subr.bf16.mxu0 0
    %202 = vmatpush1.bf16.msra.mxu0 0
    %203 = vmatprep.subr.bf16.mxu0 0
    %204 = vmatpush1.bf16.msra.mxu0 0
    %205 = vmatprep.subr.bf16.mxu0 0
    %206 = vmatpush1.bf16.msra.mxu0 0
    %207 = vmatprep.subr.bf16.mxu0 0
    %208 = vmatpush1.bf16.msra.mxu0 0
    %209 = vmatprep.mubr.bf16.mxu0 0
    %210 = vmatmul.mubr.bf16.gmra.mrb[0].mxu0 %v113
    %v211 = vpop.f32.mrb[0].mxu0
    %v212 = vadd.f32 0.0, %v211
    %v213 = vpop.f32.mrb[0].mxu0
    %v214 = vpop.f32.mrb[0].mxu0
    %v215 = vadd.f32 0.0, %v214
    %v216 = vpop.f32.mrb[0].mxu0
    %217 = vmatprep.mubr.bf16.mxu0 0
    %218 = vmatmul.mubr.bf16.gmra.mrb[0].mxu0 %v114
    %v219 = vpop.f32.mrb[0].mxu0
    %v220 = vadd.f32 0.0, %v219
    %v221 = vpop.f32.mrb[0].mxu0
    %v222 = vpop.f32.mrb[0].mxu0
    %v223 = vadd.f32 0.0, %v222
    %v224 = vpop.f32.mrb[0].mxu0
    %225 = vmatprep.mubr.bf16.mxu0 0
    %226 = vmatmul.mubr.bf16.gmra.mrb[0].mxu0 %v115
    %v227 = vpop.f32.mrb[0].mxu0
    %v228 = vadd.f32 0.0, %v227
    %v229 = vpop.f32.mrb[0].mxu0
    %v230 = vpop.f32.mrb[0].mxu0
    %v231 = vadd.f32 0.0, %v230
    %v232 = vpop.f32.mrb[0].mxu0
    %233 = vmatprep.mubr.bf16.mxu0 0
    %234 = vmatmul.mubr.bf16.gmra.mrb[0].mxu0 %v116
    %v235 = vpop.f32.mrb[0].mxu0
    %v236 = vadd.f32 0.0, %v235
    %v237 = vpop.f32.mrb[0].mxu0
    %v238 = vpop.f32.mrb[0].mxu0
    %v239 = vadd.f32 0.0, %v238
    %v240 = vpop.f32.mrb[0].mxu0
    %241 = vmatprep.mubr.bf16.mxu0 0
    %242 = vmatmul.mubr.bf16.gmra.mrb[0].mxu0 %v117
    %v243 = vpop.f32.mrb[0].mxu0
    %v244 = vadd.f32 0.0, %v243
    %v245 = vpop.f32.mrb[0].mxu0
    %v246 = vpop.f32.mrb[0].mxu0
    %v247 = vadd.f32 0.0, %v246
    %v248 = vpop.f32.mrb[0].mxu0
    %249 = vmatprep.mubr.bf16.mxu0 0
    %250 = vmatmul.mubr.bf16.gmra.mrb[0].mxu0 %v118
    %v251 = vpop.f32.mrb[0].mxu0
    %v252 = vadd.f32 0.0, %v251
    %v253 = vpop.f32.mrb[0].mxu0
    %v254 = vpop.f32.mrb[0].mxu0
    %v255 = vadd.f32 0.0, %v254
    %v256 = vpop.f32.mrb[0].mxu0
    %257 = vmatprep.mubr.bf16.mxu0 0
    %258 = vmatmul.mubr.bf16.gmra.mrb[0].mxu0 %v119
    %v259 = vpop.f32.mrb[0].mxu0
    %v260 = vadd.f32 0.0, %v259
    %v261 = vpop.f32.mrb[0].mxu0
    %v262 = vpop.f32.mrb[0].mxu0
    %v263 = vadd.f32 0.0, %v262
    %v264 = vpop.f32.mrb[0].mxu0
    %265 = vmatprep.mubr.bf16.mxu0 0
    %266 = vmatmul.mubr.bf16.gmra.mrb[0].mxu0 %v120
    %v267 = vpop.f32.mrb[0].mxu0
    %v268 = vadd.f32 0.0, %v267
    %v269 = vpop.f32.mrb[0].mxu0
    %v270 = vpop.f32.mrb[0].mxu0
    %v271 = vadd.f32 0.0, %v270
    %v272 = vpop.f32.mrb[0].mxu0
    %273 = vdwg.mxu0
    %p274 = scmp.eq.s32.totalorder 0, 0
    // Predicated region
    $region22: #{tpu_custom_call.1} parent=1 // pred_check
      %p275 = pneg %p274
    $region23: #{tpu_custom_call.1} parent=1 // pred_check_branch
      %277 = sbr.rel (%p275) target = $region25
    $region24: #{tpu_custom_call.1} parent=1 // pred_region
      %278 = vst [vmem:[#allocation2] sm:$0xff] %v212
      %279 = vst [vmem:[#allocation2 + $0x8] sm:$0xff] %v215
      %280 = vst [vmem:[#allocation2 + $0x10] sm:$0xff] %v220
      %281 = vst [vmem:[#allocation2 + $0x18] sm:$0xff] %v223
      %282 = vst [vmem:[#allocation2 + $0x20] sm:$0xff] %v228
      %283 = vst [vmem:[#allocation2 + $0x28] sm:$0xff] %v231
      %284 = vst [vmem:[#allocation2 + $0x30] sm:$0xff] %v236
      %285 = vst [vmem:[#allocation2 + $0x38] sm:$0xff] %v239
      %286 = vst [vmem:[#allocation2 + $0x40] sm:$0xff] %v244
      %287 = vst [vmem:[#allocation2 + $0x48] sm:$0xff] %v247
      %288 = vst [vmem:[#allocation2 + $0x50] sm:$0xff] %v252
      %289 = vst [vmem:[#allocation2 + $0x58] sm:$0xff] %v255
      %290 = vst [vmem:[#allocation2 + $0x60] sm:$0xff] %v260
      %291 = vst [vmem:[#allocation2 + $0x68] sm:$0xff] %v263
      %292 = vst [vmem:[#allocation2 + $0x70] sm:$0xff] %v268
      %293 = vst [vmem:[#allocation2 + $0x78] sm:$0xff] %v271
    $region25: #{tpu_custom_call.1} parent=1 // pred_fallthru
      _
    %p294 = scmp.gt.s32.totalorder 0, 0
    // Predicated region
    $region26: #{tpu_custom_call.1} parent=1 // pred_check
      %p295 = pneg %p294
    $region27: #{tpu_custom_call.1} parent=1 // pred_check_branch
      %297 = sbr.rel (%p295) target = $region29
    $region28: #{tpu_custom_call.1} parent=1 // pred_region
      %v298 = vld [vmem:[#allocation2] sm:$0xff]
      %v299 = vld [vmem:[#allocation2 + $0x8] sm:$0xff]
      %v300 = vld [vmem:[#allocation2 + $0x10] sm:$0xff]
      %v301 = vld [vmem:[#allocation2 + $0x18] sm:$0xff]
      %v302 = vld [vmem:[#allocation2 + $0x20] sm:$0xff]
      %v303 = vld [vmem:[#allocation2 + $0x28] sm:$0xff]
      %v304 = vld [vmem:[#allocation2 + $0x30] sm:$0xff]
      %v305 = vld [vmem:[#allocation2 + $0x38] sm:$0xff]
      %v306 = vld [vmem:[#allocation2 + $0x40] sm:$0xff]
      %v307 = vld [vmem:[#allocation2 + $0x48] sm:$0xff]
      %v308 = vld [vmem:[#allocation2 + $0x50] sm:$0xff]
      %v309 = vld [vmem:[#allocation2 + $0x58] sm:$0xff]
      %v310 = vld [vmem:[#allocation2 + $0x60] sm:$0xff]
      %v311 = vld [vmem:[#allocation2 + $0x68] sm:$0xff]
      %v312 = vld [vmem:[#allocation2 + $0x70] sm:$0xff]
      %v313 = vld [vmem:[#allocation2 + $0x78] sm:$0xff]
      %v314 = vadd.f32 %v298, %v212
      %v315 = vadd.f32 %v299, %v215
      %v316 = vadd.f32 %v300, %v220
      %v317 = vadd.f32 %v301, %v223
      %v318 = vadd.f32 %v302, %v228
      %v319 = vadd.f32 %v303, %v231
      %v320 = vadd.f32 %v304, %v236
      %v321 = vadd.f32 %v305, %v239
      %v322 = vadd.f32 %v306, %v244
      %v323 = vadd.f32 %v307, %v247
      %v324 = vadd.f32 %v308, %v252
      %v325 = vadd.f32 %v309, %v255
      %v326 = vadd.f32 %v310, %v260
      %v327 = vadd.f32 %v311, %v263
      %v328 = vadd.f32 %v312, %v268
      %v329 = vadd.f32 %v313, %v271
      %330 = vst [vmem:[#allocation2] sm:$0xff] %v314
      %331 = vst [vmem:[#allocation2 + $0x8] sm:$0xff] %v315
      %332 = vst [vmem:[#allocation2 + $0x10] sm:$0xff] %v316
      %333 = vst [vmem:[#allocation2 + $0x18] sm:$0xff] %v317
      %334 = vst [vmem:[#allocation2 + $0x20] sm:$0xff] %v318
      %335 = vst [vmem:[#allocation2 + $0x28] sm:$0xff] %v319
      %336 = vst [vmem:[#allocation2 + $0x30] sm:$0xff] %v320
      %337 = vst [vmem:[#allocation2 + $0x38] sm:$0xff] %v321
      %338 = vst [vmem:[#allocation2 + $0x40] sm:$0xff] %v322
      %339 = vst [vmem:[#allocation2 + $0x48] sm:$0xff] %v323
      %340 = vst [vmem:[#allocation2 + $0x50] sm:$0xff] %v324
      %341 = vst [vmem:[#allocation2 + $0x58] sm:$0xff] %v325
      %342 = vst [vmem:[#allocation2 + $0x60] sm:$0xff] %v326
      %343 = vst [vmem:[#allocation2 + $0x68] sm:$0xff] %v327
      %344 = vst [vmem:[#allocation2 + $0x70] sm:$0xff] %v328
      %345 = vst [vmem:[#allocation2 + $0x78] sm:$0xff] %v329
    $region29: #{tpu_custom_call.1} parent=1 // pred_fallthru
      _
    // Predicated region
    $region30: #{tpu_custom_call.1} parent=1 // pred_check
      %p346 = pneg %p274
    $region31: #{tpu_custom_call.1} parent=1 // pred_check_branch
      %348 = sbr.rel (%p346) target = $region33
    $region32: #{tpu_custom_call.1} parent=1 // pred_region
      %v349 = vld [vmem:[#allocation2] sm:$0xff]
      %v350 = vld [vmem:[#allocation2 + $0x8] sm:$0xff]
      %v351 = vld [vmem:[#allocation2 + $0x10] sm:$0xff]
      %v352 = vld [vmem:[#allocation2 + $0x18] sm:$0xff]
      %v353 = vld [vmem:[#allocation2 + $0x20] sm:$0xff]
      %v354 = vld [vmem:[#allocation2 + $0x28] sm:$0xff]
      %v355 = vld [vmem:[#allocation2 + $0x30] sm:$0xff]
      %v356 = vld [vmem:[#allocation2 + $0x38] sm:$0xff]
      %v357 = vld [vmem:[#allocation2 + $0x40] sm:$0xff]
      %v358 = vld [vmem:[#allocation2 + $0x48] sm:$0xff]
      %v359 = vld [vmem:[#allocation2 + $0x50] sm:$0xff]
      %v360 = vld [vmem:[#allocation2 + $0x58] sm:$0xff]
      %v361 = vld [vmem:[#allocation2 + $0x60] sm:$0xff]
      %v362 = vld [vmem:[#allocation2 + $0x68] sm:$0xff]
      %v363 = vld [vmem:[#allocation2 + $0x70] sm:$0xff]
      %v364 = vld [vmem:[#allocation2 + $0x78] sm:$0xff]
      %v365 = vld [vmem:[%s2] sm:$0x1]
      %v366 = vlaneseq
      %v367 = vshrl.u32 %v366, 7
      %v368 = vsub.s32 0, %v367
      %v369 = vrot.slane %v365, %v368
      %v370 = vadd.f32 %v349, %v369
      %v371 = vadd.f32 %v350, %v369
      %v372 = vadd.f32 %v351, %v369
      %v373 = vadd.f32 %v352, %v369
      %v374 = vadd.f32 %v353, %v369
      %v375 = vadd.f32 %v354, %v369
      %v376 = vadd.f32 %v355, %v369
      %v377 = vadd.f32 %v356, %v369
      %v378 = vadd.f32 %v357, %v369
      %v379 = vadd.f32 %v358, %v369
      %v380 = vadd.f32 %v359, %v369
      %v381 = vadd.f32 %v360, %v369
      %v382 = vadd.f32 %v361, %v369
      %v383 = vadd.f32 %v362, %v369
      %v384 = vadd.f32 %v363, %v369
      %v385 = vadd.f32 %v364, %v369
      %386 = vst [vmem:[#allocation8] sm:$0xff] %v370
      %387 = vst [vmem:[#allocation8 + $0x8] sm:$0xff] %v371
      %388 = vst [vmem:[#allocation8 + $0x10] sm:$0xff] %v372
      %389 = vst [vmem:[#allocation8 + $0x18] sm:$0xff] %v373
      %390 = vst [vmem:[#allocation8 + $0x20] sm:$0xff] %v374
      %391 = vst [vmem:[#allocation8 + $0x28] sm:$0xff] %v375
      %392 = vst [vmem:[#allocation8 + $0x30] sm:$0xff] %v376
      %393 = vst [vmem:[#allocation8 + $0x38] sm:$0xff] %v377
      %394 = vst [vmem:[#allocation8 + $0x40] sm:$0xff] %v378
      %395 = vst [vmem:[#allocation8 + $0x48] sm:$0xff] %v379
      %396 = vst [vmem:[#allocation8 + $0x50] sm:$0xff] %v380
      %397 = vst [vmem:[#allocation8 + $0x58] sm:$0xff] %v381
      %398 = vst [vmem:[#allocation8 + $0x60] sm:$0xff] %v382
      %399 = vst [vmem:[#allocation8 + $0x68] sm:$0xff] %v383
      %400 = vst [vmem:[#allocation8 + $0x70] sm:$0xff] %v384
      %401 = vst [vmem:[#allocation8 + $0x78] sm:$0xff] %v385
      %v402 = vld [vmem:[#allocation2] sm:$0xff]
      %v403 = vld [vmem:[#allocation2 + $0x8] sm:$0xff]
      %v404 = vld [vmem:[#allocation2 + $0x10] sm:$0xff]
      %v405 = vld [vmem:[#allocation2 + $0x18] sm:$0xff]
      %v406 = vld [vmem:[#allocation2 + $0x20] sm:$0xff]
      %v407 = vld [vmem:[#allocation2 + $0x28] sm:$0xff]
      %v408 = vld [vmem:[#allocation2 + $0x30] sm:$0xff]
      %v409 = vld [vmem:[#allocation2 + $0x38] sm:$0xff]
      %v410 = vld [vmem:[#allocation2 + $0x40] sm:$0xff]
      %v411 = vld [vmem:[#allocation2 + $0x48] sm:$0xff]
      %v412 = vld [vmem:[#allocation2 + $0x50] sm:$0xff]
      %v413 = vld [vmem:[#allocation2 + $0x58] sm:$0xff]
      %v414 = vld [vmem:[#allocation2 + $0x60] sm:$0xff]
      %v415 = vld [vmem:[#allocation2 + $0x68] sm:$0xff]
      %v416 = vld [vmem:[#allocation2 + $0x70] sm:$0xff]
      %v417 = vld [vmem:[#allocation2 + $0x78] sm:$0xff]
      %v418 = vld [vmem:[%s2 + $0x1] sm:$0x1]
      %v419 = vlaneseq
      %v420 = vshrl.u32 %v419, 7
      %v421 = vsub.s32 0, %v420
      %v422 = vrot.slane %v418, %v421
      %v423 = vadd.f32 %v402, %v422
      %v424 = vadd.f32 %v403, %v422
      %v425 = vadd.f32 %v404, %v422
      %v426 = vadd.f32 %v405, %v422
      %v427 = vadd.f32 %v406, %v422
      %v428 = vadd.f32 %v407, %v422
      %v429 = vadd.f32 %v408, %v422
      %v430 = vadd.f32 %v409, %v422
      %v431 = vadd.f32 %v410, %v422
      %v432 = vadd.f32 %v411, %v422
      %v433 = vadd.f32 %v412, %v422
      %v434 = vadd.f32 %v413, %v422
      %v435 = vadd.f32 %v414, %v422
      %v436 = vadd.f32 %v415, %v422
      %v437 = vadd.f32 %v416, %v422
      %v438 = vadd.f32 %v417, %v422
      %s439 = scalar_lea.vmem [#allocation8], 128
      %440 = vst [vmem:[%s439] sm:$0xff] %v423
      %441 = vst [vmem:[%s439 + $0x8] sm:$0xff] %v424
      %442 = vst [vmem:[%s439 + $0x10] sm:$0xff] %v425
      %443 = vst [vmem:[%s439 + $0x18] sm:$0xff] %v426
      %444 = vst [vmem:[%s439 + $0x20] sm:$0xff] %v427
      %445 = vst [vmem:[%s439 + $0x28] sm:$0xff] %v428
      %446 = vst [vmem:[%s439 + $0x30] sm:$0xff] %v429
      %447 = vst [vmem:[%s439 + $0x38] sm:$0xff] %v430
      %448 = vst [vmem:[%s439 + $0x40] sm:$0xff] %v431
      %449 = vst [vmem:[%s439 + $0x48] sm:$0xff] %v432
      %450 = vst [vmem:[%s439 + $0x50] sm:$0xff] %v433
      %451 = vst [vmem:[%s439 + $0x58] sm:$0xff] %v434
      %452 = vst [vmem:[%s439 + $0x60] sm:$0xff] %v435
      %453 = vst [vmem:[%s439 + $0x68] sm:$0xff] %v436
      %454 = vst [vmem:[%s439 + $0x70] sm:$0xff] %v437
      %455 = vst [vmem:[%s439 + $0x78] sm:$0xff] %v438
    $region33: #{tpu_custom_call.1} parent=1 // pred_fallthru
      _
    // Predicated region
    $region34: #{tpu_custom_call.1} parent=1 // pred_check
      _
    $region35: #{tpu_custom_call.1} parent=1 // pred_check_branch
      %457 = sbr.rel (0) target = $region37
    $region36: #{tpu_custom_call.1} parent=1 // pred_region
      %s459 = ssub.s32 4096, 4096
      %460 = vsyncadd [#allocation5], %s459
      %s461 = sshll.u32 [#allocation8], 4
      %s462 = int_to_ptr.vmem [resolvable:$true] %s461
      %467 = dma.vmem_to_hbm [thread:$0]  %s462, 4096, %s3, [#allocation5], 128, 128, 8
    $region37: #{tpu_custom_call.1} parent=1 // pred_fallthru
      _
    // Predicated region
    $region38: #{tpu_custom_call.1} parent=1 // pred_check
      _
    $region39: #{tpu_custom_call.1} parent=1 // pred_check_branch
      %469 = sbr.rel (0) target = $region41
    $region40: #{tpu_custom_call.1} parent=1 // pred_region
      %470 = dma.done [#allocation5], 4096
    $region41: #{tpu_custom_call.1} parent=1 // pred_fallthru
      _
    %471 = vsyncpa [#allocation4], 1
    %472 = vsyncpa [#allocation7], 1
    %473 = vsyncpa [#allocation5], 1

</llo_original>
